<compile_context>
chip_gen: v6e
topology: v6e:2x2x1
jax: 0.10.0
libtpu: 0.0.40
codegen_flags: <defaults>
</compile_context>

<pallas_src>
import functools

import jax
import jax.numpy as jnp
from jax import lax
from jax.experimental import pallas as pl
from jax.experimental.pallas import tpu as pltpu


def _recip(x):
    """EUP approx reciprocal + one Newton step (≈ f32-exact, VPU-cheap)."""
    r = pl.reciprocal(x, approx=True)
    return r * (2.0 - x * r)


# ----------------------------------------------------------------------------
# Pallas kernel: max-IoU matching + ignore-region IoF + label encoding.
# ----------------------------------------------------------------------------
def _match_encode_kernel(gtnum_ref, ignum_ref,          # scalar prefetch (SMEM)
                         boxes_ref, gt_ref, ig_ref,     # inputs (VMEM)
                         out_ref,                       # output (VMEM)
                         ig_scr,                        # scratch (VMEM)
                         *, BT, pos_iou, neg_iou, ig_iof):
    g = pl.program_id(0)
    M = gt_ref.shape[1]                  # max gt boxes (sublane axis of IoU)
    Np = boxes_ref.shape[2]              # lane-padded proposal count

    eps = jnp.float32(1e-6)
    # Hoisted invariants (shared across the BT sub-batch loop).
    row = lax.broadcasted_iota(jnp.int32, (M, Np), 0)    # gt index on sublanes
    pad_rows = jnp.zeros((5, Np), jnp.float32)           # rows 19..23 of the tile

    for bt in range(BT):                                 # short, unrolled
        b = g * BT + bt                                  # global batch index
        boxes = boxes_ref[bt]                            # (4, Np)  coords on sublanes
        gt = gt_ref[b]                                   # (M, 14)  natural layout
        ig = ig_ref[b]                                   # (M, 4)
        gt_num = gtnum_ref[b]
        ig_num = ignum_ref[b]

        bx1 = boxes[0:1, :]                              # (1, Np)
        by1 = boxes[1:2, :]
        bx2 = boxes[2:3, :]
        by2 = boxes[3:4, :]

        gx1 = gt[:, 0:1]                                 # (M, 1)
        gy1 = gt[:, 1:2]
        gx2 = gt[:, 2:3]
        gy2 = gt[:, 3:4]

        # ---- pairwise IoU (M, Np): gt on sublanes, proposals on lanes ----
        iw = jnp.maximum(jnp.minimum(bx2, gx2) - jnp.maximum(bx1, gx1), 0.0)
        ih = jnp.maximum(jnp.minimum(by2, gy2) - jnp.maximum(by1, gy1), 0.0)
        inter = iw * ih
        area_b = (bx2 - bx1) * (by2 - by1)               # (1, Np)
        area_g = (gx2 - gx1) * (gy2 - gy1)               # (M, 1)
        iou = inter * _recip(area_b + area_g - inter + eps)

        valid = row < gt_num
        iou = jnp.where(valid, iou, -1.0)

        max_iou = jnp.max(iou, axis=0, keepdims=True)    # (1, Np)
        is_max = jnp.logical_and(iou >= max_iou, valid)
        idx = jnp.where(is_max, row, M)
        first_idx = jnp.min(idx, axis=0, keepdims=True)  # lowest gt id on ties
        match_gt_id = jnp.where(first_idx >= M, -1, first_idx).astype(jnp.int32)

        pos = max_iou >= pos_iou
        neg = max_iou < neg_iou
        match_pos_flag = pos.astype(jnp.float32) - neg.astype(jnp.float32)  # 1/0/-1

        # ---- ignore-region IoF: computed only when ig_num > 0 ----
        ig_scr[...] = jnp.zeros_like(ig_scr)

        @pl.when(ig_num > 0)
        def _():
            rx1 = ig[:, 0:1]
            ry1 = ig[:, 1:2]
            rx2 = ig[:, 2:3]
            ry2 = ig[:, 3:4]
            riw = jnp.maximum(jnp.minimum(bx2, rx2) - jnp.maximum(bx1, rx1), 0.0)
            rih = jnp.maximum(jnp.minimum(by2, ry2) - jnp.maximum(by1, ry1), 0.0)
            iof = (riw * rih) * _recip(area_b + eps)
            iof = jnp.where(row < ig_num, iof, 0.0)
            ig_scr[...] = jnp.max(iof, axis=0, keepdims=True)

        ig_flag = ig_scr[...] > ig_iof                   # (1, Np) bool

        # ---- gather matched gt attributes with one tiny MXU matmul ----
        onehot = (row == match_gt_id).astype(jnp.float32)          # (M, Np), exact 0/1
        matched = lax.dot_general(                                  # (14, Np)
            gt, onehot, (((0,), (0,)), ((), ())),
            preferred_element_type=jnp.float32)

        # ---- RCNN-style 2D bbox delta encoding (shared reciprocals) ----
        posf = pos.astype(jnp.float32)                              # (1, Np)
        mgx1 = matched[0:1, :]
        mgy1 = matched[1:2, :]
        mgx2 = matched[2:3, :]
        mgy2 = matched[3:4, :]
        pw = jnp.maximum(bx2 - bx1, eps)
        ph = jnp.maximum(by2 - by1, eps)
        inv_pw = 1.0 / pw
        inv_ph = 1.0 / ph
        pcx = (bx1 + bx2) * 0.5
        pcy = (by1 + by2) * 0.5
        gw = jnp.maximum(mgx2 - mgx1, eps)
        gh = jnp.maximum(mgy2 - mgy1, eps)
        gcx = (mgx1 + mgx2) * 0.5
        gcy = (mgy1 + mgy2) * 0.5
        dx = (gcx - pcx) * inv_pw
        dy = (gcy - pcy) * inv_ph
        dw = jnp.log(gw * inv_pw)
        dh = jnp.log(gh * inv_ph)

        # classification label: 1 fg, 0 bg, -1 ignore (between thresholds / ig region)
        # TODO(synk): binary fg/bg label only; multi-class id of the matched gt
        # (torch label-encoder parity) is not emitted here.
        cls = jnp.where(pos, 1.0, jnp.where(match_pos_flag == 0.0, -1.0, 0.0))
        cls = jnp.where(jnp.logical_and(ig_flag, jnp.logical_not(pos)), -1.0, cls)

        # ---- build the full (24, Np) tile and store it with one bulk write ----
        deltas = jnp.concatenate([dx, dy, dw, dh], axis=0) * posf   # (4, Np)
        targets3d = matched[4:14, :] * posf                         # (10, Np)
        flags = jnp.concatenate(
            [match_pos_flag,
             match_gt_id.astype(jnp.float32),
             ig_flag.astype(jnp.float32)], axis=0)                  # (3, Np)
        tile = jnp.concatenate(
            [cls, deltas, targets3d, posf, flags, pad_rows], axis=0)  # (24, Np)
        out_ref[bt] = tile


def match_and_encode(boxes, gt_boxes, ig_regions, gt_num_i32, ig_num_i32,
                     *, pos_iou=0.5, neg_iou=0.4, ig_iof=0.5):
    """boxes (B,N,4) f32, gt_boxes (B,M,14) f32, ig_regions (B,M,4) f32.

    Returns out (B, 24, N) f32:
      rows 0..15 : [cls, dx, dy, dw, dh, 3D targets(10), pos_weight]
      rows 16..18: [match_pos_flag, match_gt_id, ig_flag]  (integer-valued f32)
      rows 19..23: zero padding (sublane alignment).
    """
    B, N, _ = boxes.shape
    M, C = gt_boxes.shape[1], gt_boxes.shape[2]
    assert ig_regions.shape[1] == M

    # Lane padding: proposal axis up to a multiple of 128 with zero-area boxes
    # (IoU/IoF == 0 → background; padded columns are sliced off afterwards).
    Np = max(128, ((N + 127) // 128) * 128)
    # Batch tiling: amortize per-grid-step overhead while keeping >= 2 grid
    # grains whenever B >= 2 so both v7x TensorCores get work.
    if B >= 8:
        BT = 4
    elif B >= 4:
        BT = 2
    else:
        BT = 1
    G = -(-B // BT)
    Bp = G * BT

    boxes_f = boxes.astype(jnp.float32)
    gt_f = gt_boxes.astype(jnp.float32)
    ig_f = ig_regions.astype(jnp.float32)
    gtn = gt_num_i32.astype(jnp.int32)
    ign = ig_num_i32.astype(jnp.int32)

    if Np != N:
        boxes_f = jnp.pad(boxes_f, ((0, 0), (0, Np - N), (0, 0)))
    if Bp != B:
        pb = Bp - B
        boxes_f = jnp.pad(boxes_f, ((0, pb), (0, 0), (0, 0)))
        gt_f = jnp.pad(gt_f, ((0, pb), (0, 0), (0, 0)))
        ig_f = jnp.pad(ig_f, ((0, pb), (0, 0), (0, 0)))
        gtn = jnp.pad(gtn, ((0, pb),))
        ign = jnp.pad(ign, ((0, pb),))

    # Single wrapper-side transpose so proposals land on lanes.
    boxes_t = jnp.transpose(boxes_f, (0, 2, 1))          # (Bp, 4, Np)

    kernel = functools.partial(
        _match_encode_kernel, BT=BT,
        pos_iou=pos_iou, neg_iou=neg_iou, ig_iof=ig_iof)

    grid_spec = pltpu.PrefetchScalarGridSpec(
        num_scalar_prefetch=2,
        grid=(G,),
        in_specs=[
            pl.BlockSpec((BT, 4, Np), lambda g, gtn, ign: (g, 0, 0)),
            # gt / ig are tiny: keep them resident (constant block index → one DMA).
            pl.BlockSpec((Bp, M, C), lambda g, gtn, ign: (0, 0, 0)),
            pl.BlockSpec((Bp, M, 4), lambda g, gtn, ign: (0, 0, 0)),
        ],
        out_specs=pl.BlockSpec((BT, 24, Np), lambda g, gtn, ign: (g, 0, 0)),
        scratch_shapes=[pltpu.VMEM((1, Np), jnp.float32)],   # max-IoF scratch
    )

    out = pl.pallas_call(
        kernel,
        out_shape=jax.ShapeDtypeStruct((Bp, 24, Np), jnp.float32),
        grid_spec=grid_spec,
        compiler_params=pltpu.CompilerParams(
            dimension_semantics=("parallel",)),   # batch grains independent → megacore
    )(gtn, ign, boxes_t, gt_f, ig_f)

    return out[:B, :, :N]


# ----------------------------------------------------------------------------
# ProposalTargetRoi3D wrapper (configuration + glue + Pallas hot path).
# ----------------------------------------------------------------------------
class ProposalTargetRoi3D:
    def __init__(self, focal_length_default, classid_table, min_box_edge,
                 max_gt_boxes_num, max_depth,
                 add_gt_bbox_to_proposal=True, only_use_gt_rois=False,
                 pos_iou=0.5, neg_iou=0.4, ig_iof=0.5):
        self.focal_length_default = float(focal_length_default)
        self.classid_table = classid_table            # lookup table: cls_id -> mapped id
        self.min_box_edge = min_box_edge              # stored (unused in this forward path)
        self.max_gt_boxes_num = int(max_gt_boxes_num)
        self.max_depth = float(max_depth)
        self.add_gt_bbox_to_proposal = add_gt_bbox_to_proposal
        self.only_use_gt_rois = only_use_gt_rois
        self.pos_iou = pos_iou
        self.neg_iou = neg_iou
        self.ig_iof = ig_iof
        # TODO(synk): undistort_depth_uv / input_padding / sampler branches not exercised here.

    # --- _gt_label_generate (JAX glue; per-sample filter + compaction) ---
    def _gt_label_generate(self, data):
        max_gt = self.max_gt_boxes_num
        cls_table = self.classid_table
        fdef = self.focal_length_default
        max_depth = self.max_depth

        def per_sample(calib, bboxes, loc_off, dims, rot_y, depths, locs, cls_ids):
            nonpad = cls_ids > 0
            mapped = cls_table[jnp.clip(cls_ids, 0, cls_table.shape[0] - 1)]
            f_cls = mapped >= 0
            f_depth = depths <= max_depth
            wh = bboxes[:, 2:4] - bboxes[:, 0:2]
            f_wh = jnp.min(wh, axis=-1) > 0
            valid = nonpad & f_cls & f_depth & f_wh
            order = jnp.argsort(jnp.logical_not(valid), stable=True)  # valid rows first
            n = jnp.minimum(jnp.sum(valid.astype(jnp.int32)), max_gt)
            idx = order[:max_gt]
            rv = (jnp.arange(max_gt) < n)[:, None].astype(jnp.float32)
            scale = fdef / calib[0, 0]
            proj = bboxes[idx] * rv                                   # (M, 4)
            lo = loc_off[idx][:, :2] * scale * rv                     # (M, 2)
            d = (depths[idx] * scale)[:, None] * rv                   # (M, 1)
            dm = dims[idx] * rv                                       # (M, 3)
            lc = locs[idx] * rv                                       # (M, 3)
            ry = rot_y[idx][:, None] * rv                             # (M, 1)
            gt = jnp.concatenate([proj, lo, d, dm, lc, ry], axis=-1).astype(jnp.float32)
            return gt, n.astype(jnp.float32)

        gt_boxes, gt_boxes_num = jax.vmap(per_sample)(
            data["calib"], data["bboxes"], data["location_offsets"],
            data["dims"], data["rotation_ys"], data["depths"],
            data["locations"], data["cls_ids"])

        B = gt_boxes.shape[0]
        ig_regions = jnp.zeros((B, max_gt, 4), jnp.float32)
        ig_regions_num = jnp.zeros((B,), jnp.float32)
        return {
            "gt_boxes": gt_boxes,
            "gt_boxes_num": gt_boxes_num,
            "ig_regions": ig_regions,
            "ig_regions_num": ig_regions_num,
            "calib": data["calib"].astype(jnp.float32),
            "im_hw": data["im_hw"].astype(jnp.float32),
            "trans_mat": data["trans_matrix"].astype(jnp.float32),
            "distCoeffs": data["distCoeffs"],
        }

    def __call__(self, boxes, **data):
        gen = self._gt_label_generate(data)
        gt_boxes = gen["gt_boxes"]

        # ProposalTarget._match_and_sample proposal augmentation (glue)
        if self.only_use_gt_rois:
            rois = gt_boxes[:, :, 0:4]
        elif self.add_gt_bbox_to_proposal:
            rois = jnp.concatenate([boxes, gt_boxes[:, :, 0:4]], axis=1)
        else:
            rois = boxes
        rois = rois.astype(jnp.float32)

        gt_num_i32 = gen["gt_boxes_num"].astype(jnp.int32)
        ig_num_i32 = gen["ig_regions_num"].astype(jnp.int32)

        out = match_and_encode(
            rois, gt_boxes, gen["ig_regions"], gt_num_i32, ig_num_i32,
            pos_iou=self.pos_iou, neg_iou=self.neg_iou, ig_iof=self.ig_iof)

        # Cheap wrapper-side transpose / split back to (B, N, C) views.
        lab = jnp.transpose(out[:, 0:16, :], (0, 2, 1))    # (B, N, 16)

        labels = {
            "cls_label": lab[..., 0:1],
            "bbox_reg_target": lab[..., 1:5],
            "location_offset_target": lab[..., 5:7],
            "depth_target": lab[..., 7:8],
            "dim_target": lab[..., 8:11],
            "location_target": lab[..., 11:14],
            "rotation_y_target": lab[..., 14:15],
            "pos_weight": lab[..., 15:16],
            "match_pos_flag": out[:, 16, :].astype(jnp.int32),
            "match_gt_id": out[:, 17, :].astype(jnp.int32),
            "ig_flag": out[:, 18, :].astype(jnp.int32),
            "trans_mat": gen["trans_mat"],
            "calib": gen["calib"],
            "distCoeffs": gen["distCoeffs"],
            "eq_fu": None,
            "eq_fv": None,
            "loss_custom_weight": None,
        }
        return rois, labels


# ----------------------------------------------------------------------------
# Demo
# ----------------------------------------------------------------------------
if __name__ == "__main__":
    key = jax.random.PRNGKey(0)
    B, K, N_PROP, MAX_GT = 2, 12, 56, 8

    ks = jax.random.split(key, 12)

    # proposals (B, N, 4): x1, y1, x2, y2
    pxy = jax.random.uniform(ks[0], (B, N_PROP, 2), minval=0.0, maxval=200.0)
    pwh = jax.random.uniform(ks[1], (B, N_PROP, 2), minval=5.0, maxval=60.0)
    proposals = jnp.concatenate([pxy, pxy + pwh], axis=-1).astype(jnp.float32)

    # raw gt annotations (B, K, ...)
    gxy = jax.random.uniform(ks[2], (B, K, 2), minval=0.0, maxval=200.0)
    gwh = jax.random.uniform(ks[3], (B, K, 2), minval=4.0, maxval=70.0)
    gt_bboxes = jnp.concatenate([gxy, gxy + gwh], axis=-1).astype(jnp.float32)

    depths = jax.random.uniform(ks[4], (B, K), minval=1.0, maxval=120.0)
    dims = jax.random.uniform(ks[5], (B, K, 3), minval=0.5, maxval=3.0)
    rotation_ys = jax.random.uniform(ks[6], (B, K), minval=-3.14, maxval=3.14)
    locations = jax.random.uniform(ks[7], (B, K, 3), minval=-20.0, maxval=20.0)
    location_offsets = jax.random.uniform(ks[8], (B, K, 3), minval=-5.0, maxval=5.0)

    # class ids: 1..5 real, 0 = padding (padding placed at the end)
    raw_cls = jax.random.randint(ks[9], (B, K), 1, 6)
    valid_counts = jnp.array([9, 5], jnp.int32)
    cls_ids = jnp.where(jnp.arange(K)[None, :] < valid_counts[:, None], raw_cls, 0)

    calib = jnp.tile(jnp.array([[720.0, 0.0, 480.0, 0.0],
                                [0.0, 720.0, 270.0, 0.0],
                                [0.0, 0.0, 1.0, 0.0]], jnp.float32), (B, 1, 1))
    trans_matrix = jnp.tile(jnp.diag(jnp.array([0.5, 0.5, 1.0], jnp.float32)), (B, 1, 1))
    im_hw = jnp.tile(jnp.array([512.0, 960.0], jnp.float32), (B, 1))
    distCoeffs = jnp.zeros((B, 8), jnp.float32)

    # classid_map = {1:0, 2:1, 3:-1, 4:2, 5:3}; index 0 is padding -> -1
    classid_table = jnp.array([-1, 0, 1, -1, 2, 3], jnp.int32)

    module = ProposalTargetRoi3D(
        focal_length_default=1000.0,
        classid_table=classid_table,
        min_box_edge=2,
        max_gt_boxes_num=MAX_GT,
        max_depth=100.0,
        add_gt_bbox_to_proposal=True,
    )

    rois, labels = module(
        proposals,
        calib=calib,
        bboxes=gt_bboxes,
        location_offsets=location_offsets,
        dims=dims,
        rotation_ys=rotation_ys,
        depths=depths,
        locations=locations,
        trans_matrix=trans_matrix,
        im_hw=im_hw,
        cls_ids=cls_ids,
        distCoeffs=distCoeffs,
    )

    jax.block_until_ready(rois)
    jax.block_until_ready(labels["cls_label"])
    jax.block_until_ready(labels["bbox_reg_target"])
    jax.block_until_ready(labels["match_pos_flag"])
    print("KERNEL_OK")
</pallas_src>

<mosaic_0001>
module attributes {stable_mosaic.version = 11 : i64} {
  func.func @_match_encode_kernel(%arg0: i32, %arg1: memref<2xi32, #tpu.memory_space<smem>>, %arg2: memref<2xi32, #tpu.memory_space<smem>>, %arg3: memref<1x4x128xf32, #tpu.memory_space<vmem>>, %arg4: memref<2x8x14xf32, #tpu.memory_space<vmem>>, %arg5: memref<2x8x4xf32, #tpu.memory_space<vmem>>, %arg6: memref<1x24x128xf32, #tpu.memory_space<vmem>>, %arg7: memref<1x128xf32, #tpu.memory_space<vmem>>) attributes {dimension_semantics = [#tpu.dimension_semantics<parallel>], iteration_bounds = array<i64: 2>, scalar_prefetch = 2 : i64, scratch_operands = 1 : i64, tpu.core_type = #tpu.core_type<tc>, window_params = [{transform_indices = @transform_0, window_bounds = array<i64: 1, 4, 128>}, {pipeline_mode = #tpu.pipeline_mode<synchronous>, transform_indices = @transform_1, window_bounds = array<i64: 2, 8, 14>}, {pipeline_mode = #tpu.pipeline_mode<synchronous>, transform_indices = @transform_2, window_bounds = array<i64: 2, 8, 4>}, {transform_indices = @transform_3, window_bounds = array<i64: 1, 24, 128>}]} {
    %0 = tpu.iota {dimensions = array<i32: 0>} : vector<8x128xi32>
    %cst = arith.constant 0.000000e+00 : f32
    %1 = vector.broadcast %cst : f32 to vector<5x128xf32>
    %c1_i32 = arith.constant 1 : i32
    %2 = arith.muli %arg0, %c1_i32 : i32
    %c0_i32 = arith.constant 0 : i32
    %3 = arith.addi %2, %c0_i32 : i32
    %c0 = arith.constant 0 : index
    %c0_0 = arith.constant 0 : index
    %c0_1 = arith.constant 0 : index
    %4 = vector.load %arg3[%c0, %c0_0, %c0_1] : memref<1x4x128xf32, #tpu.memory_space<vmem>>, vector<1x4x128xf32>
    %5 = vector.shape_cast %4 : vector<1x4x128xf32> to vector<4x128xf32>
    %6 = arith.index_cast %3 : i32 to index
    %c0_2 = arith.constant 0 : index
    %c0_3 = arith.constant 0 : index
    %7 = vector.load %arg4[%6, %c0_2, %c0_3] : memref<2x8x14xf32, #tpu.memory_space<vmem>>, vector<1x8x14xf32>
    %8 = vector.shape_cast %7 : vector<1x8x14xf32> to vector<8x14xf32>
    %9 = arith.index_cast %3 : i32 to index
    %c0_4 = arith.constant 0 : index
    %c0_5 = arith.constant 0 : index
    %10 = vector.load %arg5[%9, %c0_4, %c0_5] : memref<2x8x4xf32, #tpu.memory_space<vmem>>, vector<1x8x4xf32>
    %11 = vector.shape_cast %10 : vector<1x8x4xf32> to vector<8x4xf32>
    %12 = arith.index_cast %3 : i32 to index
    %13 = memref.load %arg1[%12] : memref<2xi32, #tpu.memory_space<smem>>
    %14 = arith.index_cast %3 : i32 to index
    %15 = memref.load %arg2[%14] : memref<2xi32, #tpu.memory_space<smem>>
    %16 = vector.extract_strided_slice %5 {offsets = [0, 0], sizes = [1, 128], strides = [1, 1]} : vector<4x128xf32> to vector<1x128xf32>
    %17 = vector.extract_strided_slice %5 {offsets = [1, 0], sizes = [1, 128], strides = [1, 1]} : vector<4x128xf32> to vector<1x128xf32>
    %18 = vector.extract_strided_slice %5 {offsets = [2, 0], sizes = [1, 128], strides = [1, 1]} : vector<4x128xf32> to vector<1x128xf32>
    %19 = vector.extract_strided_slice %5 {offsets = [3, 0], sizes = [1, 128], strides = [1, 1]} : vector<4x128xf32> to vector<1x128xf32>
    %20 = vector.extract_strided_slice %8 {offsets = [0, 0], sizes = [8, 1], strides = [1, 1]} : vector<8x14xf32> to vector<8x1xf32>
    %21 = vector.extract_strided_slice %8 {offsets = [0, 1], sizes = [8, 1], strides = [1, 1]} : vector<8x14xf32> to vector<8x1xf32>
    %22 = vector.extract_strided_slice %8 {offsets = [0, 2], sizes = [8, 1], strides = [1, 1]} : vector<8x14xf32> to vector<8x1xf32>
    %23 = vector.extract_strided_slice %8 {offsets = [0, 3], sizes = [8, 1], strides = [1, 1]} : vector<8x14xf32> to vector<8x1xf32>
    %24 = vector.broadcast %18 : vector<1x128xf32> to vector<8x128xf32>
    %25 = vector.broadcast %22 : vector<8x1xf32> to vector<8x128xf32>
    %26 = arith.minimumf %24, %25 : vector<8x128xf32>
    %27 = vector.broadcast %16 : vector<1x128xf32> to vector<8x128xf32>
    %28 = vector.broadcast %20 : vector<8x1xf32> to vector<8x128xf32>
    %29 = arith.maximumf %27, %28 : vector<8x128xf32>
    %30 = arith.subf %26, %29 : vector<8x128xf32>
    %cst_6 = arith.constant 0.000000e+00 : f32
    %31 = vector.broadcast %cst_6 : f32 to vector<8x128xf32>
    %32 = arith.maximumf %30, %31 : vector<8x128xf32>
    %33 = vector.broadcast %19 : vector<1x128xf32> to vector<8x128xf32>
    %34 = vector.broadcast %23 : vector<8x1xf32> to vector<8x128xf32>
    %35 = arith.minimumf %33, %34 : vector<8x128xf32>
    %36 = vector.broadcast %17 : vector<1x128xf32> to vector<8x128xf32>
    %37 = vector.broadcast %21 : vector<8x1xf32> to vector<8x128xf32>
    %38 = arith.maximumf %36, %37 : vector<8x128xf32>
    %39 = arith.subf %35, %38 : vector<8x128xf32>
    %cst_7 = arith.constant 0.000000e+00 : f32
    %40 = vector.broadcast %cst_7 : f32 to vector<8x128xf32>
    %41 = arith.maximumf %39, %40 : vector<8x128xf32>
    %42 = arith.mulf %32, %41 : vector<8x128xf32>
    %43 = arith.subf %18, %16 : vector<1x128xf32>
    %44 = arith.subf %19, %17 : vector<1x128xf32>
    %45 = arith.mulf %43, %44 : vector<1x128xf32>
    %46 = arith.subf %22, %20 : vector<8x1xf32>
    %47 = arith.subf %23, %21 : vector<8x1xf32>
    %48 = arith.mulf %46, %47 : vector<8x1xf32>
    %49 = vector.broadcast %45 : vector<1x128xf32> to vector<8x128xf32>
    %50 = vector.broadcast %48 : vector<8x1xf32> to vector<8x128xf32>
    %51 = arith.addf %49, %50 : vector<8x128xf32>
    %52 = arith.subf %51, %42 : vector<8x128xf32>
    %cst_8 = arith.constant 9.99999997E-7 : f32
    %53 = vector.broadcast %cst_8 : f32 to vector<8x128xf32>
    %54 = arith.addf %52, %53 : vector<8x128xf32>
    %55 = tpu.reciprocal %54 {approx = true} : vector<8x128xf32> -> vector<8x128xf32>
    %56 = arith.mulf %54, %55 : vector<8x128xf32>
    %cst_9 = arith.constant 2.000000e+00 : f32
    %57 = vector.broadcast %cst_9 : f32 to vector<8x128xf32>
    %58 = arith.subf %57, %56 : vector<8x128xf32>
    %59 = arith.mulf %55, %58 : vector<8x128xf32>
    %60 = arith.mulf %42, %59 : vector<8x128xf32>
    %61 = vector.broadcast %13 : i32 to vector<8x128xi32>
    %62 = arith.cmpi slt, %0, %61 : vector<8x128xi32>
    %cst_10 = arith.constant -1.000000e+00 : f32
    %63 = vector.broadcast %cst_10 : f32 to vector<8x128xf32>
    %64 = arith.select %62, %60, %63 : vector<8x128xi1>, vector<8x128xf32>
    %cst_11 = arith.constant dense<0xFF800000> : vector<128xf32>
    %65 = vector.multi_reduction <maximumf>, %64, %cst_11 [0] : vector<8x128xf32> to vector<128xf32>
    %66 = vector.shape_cast %65 : vector<128xf32> to vector<1x128xf32>
    %67 = vector.broadcast %66 : vector<1x128xf32> to vector<8x128xf32>
    %68 = arith.cmpf oge, %64, %67 : vector<8x128xf32>
    %69 = arith.andi %68, %62 : vector<8x128xi1>
    %c8_i32 = arith.constant 8 : i32
    %70 = vector.broadcast %c8_i32 : i32 to vector<8x128xi32>
    %71 = arith.select %69, %0, %70 : vector<8x128xi1>, vector<8x128xi32>
    %cst_12 = arith.constant dense<2147483647> : vector<128xi32>
    %72 = vector.multi_reduction <minsi>, %71, %cst_12 [0] : vector<8x128xi32> to vector<128xi32>
    %73 = vector.shape_cast %72 : vector<128xi32> to vector<1x128xi32>
    %c8_i32_13 = arith.constant 8 : i32
    %74 = vector.broadcast %c8_i32_13 : i32 to vector<1x128xi32>
    %75 = arith.cmpi sge, %73, %74 : vector<1x128xi32>
    %c-1_i32 = arith.constant -1 : i32
    %76 = vector.broadcast %c-1_i32 : i32 to vector<1x128xi32>
    %77 = arith.select %75, %76, %73 : vector<1x128xi1>, vector<1x128xi32>
    %cst_14 = arith.constant 5.000000e-01 : f32
    %78 = vector.broadcast %cst_14 : f32 to vector<1x128xf32>
    %79 = arith.cmpf oge, %66, %78 : vector<1x128xf32>
    %cst_15 = arith.constant 4.000000e-01 : f32
    %80 = vector.broadcast %cst_15 : f32 to vector<1x128xf32>
    %81 = arith.cmpf olt, %66, %80 : vector<1x128xf32>
    %82 = arith.extui %79 : vector<1x128xi1> to vector<1x128xi32>
    %83 = arith.sitofp %82 : vector<1x128xi32> to vector<1x128xf32>
    %84 = arith.extui %81 : vector<1x128xi1> to vector<1x128xi32>
    %85 = arith.sitofp %84 : vector<1x128xi32> to vector<1x128xf32>
    %86 = arith.subf %83, %85 : vector<1x128xf32>
    %cst_16 = arith.constant 0.000000e+00 : f32
    %87 = vector.broadcast %cst_16 : f32 to vector<1x128xf32>
    %c0_17 = arith.constant 0 : index
    %c0_18 = arith.constant 0 : index
    %88 = vector.load %arg7[%c0_17, %c0_18] : memref<1x128xf32, #tpu.memory_space<vmem>>, vector<1x128xf32>
    tpu.vector_store %arg7[%c0_17, %c0_18], %87 {strides = array<i32>} : memref<1x128xf32, #tpu.memory_space<vmem>>, vector<1x128xf32>,
    %c0_i32_19 = arith.constant 0 : i32
    %89 = arith.cmpi sgt, %15, %c0_i32_19 : i32
    %90 = arith.extui %89 : i1 to i32
    %cst_20 = arith.constant 9.99999997E-7 : f32
    %c0_i32_21 = arith.constant 0 : i32
    %91 = arith.cmpi ne, %90, %c0_i32_21 : i32
    scf.if %91 {
      %167 = vector.extract_strided_slice %11 {offsets = [0, 0], sizes = [8, 1], strides = [1, 1]} : vector<8x4xf32> to vector<8x1xf32>
      %168 = vector.extract_strided_slice %11 {offsets = [0, 1], sizes = [8, 1], strides = [1, 1]} : vector<8x4xf32> to vector<8x1xf32>
      %169 = vector.extract_strided_slice %11 {offsets = [0, 2], sizes = [8, 1], strides = [1, 1]} : vector<8x4xf32> to vector<8x1xf32>
      %170 = vector.extract_strided_slice %11 {offsets = [0, 3], sizes = [8, 1], strides = [1, 1]} : vector<8x4xf32> to vector<8x1xf32>
      %171 = vector.broadcast %18 : vector<1x128xf32> to vector<8x128xf32>
      %172 = vector.broadcast %169 : vector<8x1xf32> to vector<8x128xf32>
      %173 = arith.minimumf %171, %172 : vector<8x128xf32>
      %174 = vector.broadcast %16 : vector<1x128xf32> to vector<8x128xf32>
      %175 = vector.broadcast %167 : vector<8x1xf32> to vector<8x128xf32>
      %176 = arith.maximumf %174, %175 : vector<8x128xf32>
      %177 = arith.subf %173, %176 : vector<8x128xf32>
      %cst_45 = arith.constant 0.000000e+00 : f32
      %178 = vector.broadcast %cst_45 : f32 to vector<8x128xf32>
      %179 = arith.maximumf %177, %178 : vector<8x128xf32>
      %180 = vector.broadcast %19 : vector<1x128xf32> to vector<8x128xf32>
      %181 = vector.broadcast %170 : vector<8x1xf32> to vector<8x128xf32>
      %182 = arith.minimumf %180, %181 : vector<8x128xf32>
      %183 = vector.broadcast %17 : vector<1x128xf32> to vector<8x128xf32>
      %184 = vector.broadcast %168 : vector<8x1xf32> to vector<8x128xf32>
      %185 = arith.maximumf %183, %184 : vector<8x128xf32>
      %186 = arith.subf %182, %185 : vector<8x128xf32>
      %cst_46 = arith.constant 0.000000e+00 : f32
      %187 = vector.broadcast %cst_46 : f32 to vector<8x128xf32>
      %188 = arith.maximumf %186, %187 : vector<8x128xf32>
      %189 = arith.mulf %179, %188 : vector<8x128xf32>
      %190 = vector.broadcast %cst_20 : f32 to vector<1x128xf32>
      %191 = arith.addf %45, %190 : vector<1x128xf32>
      %192 = tpu.reciprocal %191 {approx = true} : vector<1x128xf32> -> vector<1x128xf32>
      %193 = arith.mulf %191, %192 : vector<1x128xf32>
      %cst_47 = arith.constant 2.000000e+00 : f32
      %194 = vector.broadcast %cst_47 : f32 to vector<1x128xf32>
      %195 = arith.subf %194, %193 : vector<1x128xf32>
      %196 = arith.mulf %192, %195 : vector<1x128xf32>
      %197 = vector.broadcast %196 : vector<1x128xf32> to vector<8x128xf32>
      %198 = arith.mulf %189, %197 : vector<8x128xf32>
      %199 = vector.broadcast %15 : i32 to vector<8x128xi32>
      %200 = arith.cmpi slt, %0, %199 : vector<8x128xi32>
      %cst_48 = arith.constant 0.000000e+00 : f32
      %201 = vector.broadcast %cst_48 : f32 to vector<8x128xf32>
      %202 = arith.select %200, %198, %201 : vector<8x128xi1>, vector<8x128xf32>
      %cst_49 = arith.constant dense<0xFF800000> : vector<128xf32>
      %203 = vector.multi_reduction <maximumf>, %202, %cst_49 [0] : vector<8x128xf32> to vector<128xf32>
      %204 = vector.shape_cast %203 : vector<128xf32> to vector<1x128xf32>
      %c0_50 = arith.constant 0 : index
      %c0_51 = arith.constant 0 : index
      %205 = vector.load %arg7[%c0_50, %c0_51] : memref<1x128xf32, #tpu.memory_space<vmem>>, vector<1x128xf32>
      tpu.vector_store %arg7[%c0_50, %c0_51], %204 {strides = array<i32>} : memref<1x128xf32, #tpu.memory_space<vmem>>, vector<1x128xf32>,
    } else {
    }
    %c0_22 = arith.constant 0 : index
    %c0_23 = arith.constant 0 : index
    %92 = vector.load %arg7[%c0_22, %c0_23] : memref<1x128xf32, #tpu.memory_space<vmem>>, vector<1x128xf32>
    %cst_24 = arith.constant 5.000000e-01 : f32
    %93 = vector.broadcast %cst_24 : f32 to vector<1x128xf32>
    %94 = arith.cmpf ogt, %92, %93 : vector<1x128xf32>
    %95 = vector.broadcast %77 : vector<1x128xi32> to vector<8x128xi32>
    %96 = arith.cmpi eq, %0, %95 : vector<8x128xi32>
    %97 = arith.extui %96 : vector<8x128xi1> to vector<8x128xi32>
    %98 = arith.sitofp %97 : vector<8x128xi32> to vector<8x128xf32>
    %cst_25 = arith.constant dense<0.000000e+00> : vector<14x128xf32>
    %99 = tpu.matmul %8, %98, %cst_25 {dimension_numbers = #tpu.dot_dimension_numbers<[0], [0], [1], [1], [0, 1, 1, 1], [], []>} : vector<8x14xf32>, vector<8x128xf32>, vector<14x128xf32> -> vector<14x128xf32>
    %100 = arith.extui %79 : vector<1x128xi1> to vector<1x128xi32>
    %101 = arith.sitofp %100 : vector<1x128xi32> to vector<1x128xf32>
    %102 = vector.extract_strided_slice %99 {offsets = [0, 0], sizes = [1, 128], strides = [1, 1]} : vector<14x128xf32> to vector<1x128xf32>
    %103 = vector.extract_strided_slice %99 {offsets = [1, 0], sizes = [1, 128], strides = [1, 1]} : vector<14x128xf32> to vector<1x128xf32>
    %104 = vector.extract_strided_slice %99 {offsets = [2, 0], sizes = [1, 128], strides = [1, 1]} : vector<14x128xf32> to vector<1x128xf32>
    %105 = vector.extract_strided_slice %99 {offsets = [3, 0], sizes = [1, 128], strides = [1, 1]} : vector<14x128xf32> to vector<1x128xf32>
    %106 = arith.subf %18, %16 : vector<1x128xf32>
    %cst_26 = arith.constant 9.99999997E-7 : f32
    %107 = vector.broadcast %cst_26 : f32 to vector<1x128xf32>
    %108 = arith.maximumf %106, %107 : vector<1x128xf32>
    %109 = arith.subf %19, %17 : vector<1x128xf32>
    %cst_27 = arith.constant 9.99999997E-7 : f32
    %110 = vector.broadcast %cst_27 : f32 to vector<1x128xf32>
    %111 = arith.maximumf %109, %110 : vector<1x128xf32>
    %cst_28 = arith.constant 1.000000e+00 : f32
    %112 = vector.broadcast %cst_28 : f32 to vector<1x128xf32>
    %113 = arith.divf %112, %108 : vector<1x128xf32>
    %cst_29 = arith.constant 1.000000e+00 : f32
    %114 = vector.broadcast %cst_29 : f32 to vector<1x128xf32>
    %115 = arith.divf %114, %111 : vector<1x128xf32>
    %116 = arith.addf %16, %18 : vector<1x128xf32>
    %cst_30 = arith.constant 5.000000e-01 : f32
    %117 = vector.broadcast %cst_30 : f32 to vector<1x128xf32>
    %118 = arith.mulf %116, %117 : vector<1x128xf32>
    %119 = arith.addf %17, %19 : vector<1x128xf32>
    %cst_31 = arith.constant 5.000000e-01 : f32
    %120 = vector.broadcast %cst_31 : f32 to vector<1x128xf32>
    %121 = arith.mulf %119, %120 : vector<1x128xf32>
    %122 = arith.subf %104, %102 : vector<1x128xf32>
    %cst_32 = arith.constant 9.99999997E-7 : f32
    %123 = vector.broadcast %cst_32 : f32 to vector<1x128xf32>
    %124 = arith.maximumf %122, %123 : vector<1x128xf32>
    %125 = arith.subf %105, %103 : vector<1x128xf32>
    %cst_33 = arith.constant 9.99999997E-7 : f32
    %126 = vector.broadcast %cst_33 : f32 to vector<1x128xf32>
    %127 = arith.maximumf %125, %126 : vector<1x128xf32>
    %128 = arith.addf %102, %104 : vector<1x128xf32>
    %cst_34 = arith.constant 5.000000e-01 : f32
    %129 = vector.broadcast %cst_34 : f32 to vector<1x128xf32>
    %130 = arith.mulf %128, %129 : vector<1x128xf32>
    %131 = arith.addf %103, %105 : vector<1x128xf32>
    %cst_35 = arith.constant 5.000000e-01 : f32
    %132 = vector.broadcast %cst_35 : f32 to vector<1x128xf32>
    %133 = arith.mulf %131, %132 : vector<1x128xf32>
    %134 = arith.subf %130, %118 : vector<1x128xf32>
    %135 = arith.mulf %134, %113 : vector<1x128xf32>
    %136 = arith.subf %133, %121 : vector<1x128xf32>
    %137 = arith.mulf %136, %115 : vector<1x128xf32>
    %138 = arith.mulf %124, %113 : vector<1x128xf32>
    %139 = math.log %138 : vector<1x128xf32>
    %140 = arith.mulf %127, %115 : vector<1x128xf32>
    %141 = math.log %140 : vector<1x128xf32>
    %cst_36 = arith.constant 0.000000e+00 : f32
    %142 = vector.broadcast %cst_36 : f32 to vector<1x128xf32>
    %143 = arith.cmpf oeq, %86, %142 : vector<1x128xf32>
    %cst_37 = arith.constant -1.000000e+00 : f32
    %cst_38 = arith.constant 0.000000e+00 : f32
    %144 = vector.broadcast %cst_37 : f32 to vector<1x128xf32>
    %145 = vector.broadcast %cst_38 : f32 to vector<1x128xf32>
    %146 = arith.select %143, %144, %145 : vector<1x128xi1>, vector<1x128xf32>
    %cst_39 = arith.constant 1.000000e+00 : f32
    %147 = vector.broadcast %cst_39 : f32 to vector<1x128xf32>
    %148 = arith.select %79, %147, %146 : vector<1x128xi1>, vector<1x128xf32>
    %cst_40 = arith.constant dense<true> : vector<1x128xi1>
    %149 = arith.xori %79, %cst_40 : vector<1x128xi1>
    %150 = arith.andi %94, %149 : vector<1x128xi1>
    %cst_41 = arith.constant -1.000000e+00 : f32
    %151 = vector.broadcast %cst_41 : f32 to vector<1x128xf32>
    %152 = arith.select %150, %151, %148 : vector<1x128xi1>, vector<1x128xf32>
    %153 = tpu.concatenate %135, %137, %139, %141 in 0 : vector<1x128xf32>, vector<1x128xf32>, vector<1x128xf32>, vector<1x128xf32> -> vector<4x128xf32>
    %154 = vector.broadcast %101 : vector<1x128xf32> to vector<4x128xf32>
    %155 = arith.mulf %153, %154 : vector<4x128xf32>
    %156 = vector.extract_strided_slice %99 {offsets = [4, 0], sizes = [10, 128], strides = [1, 1]} : vector<14x128xf32> to vector<10x128xf32>
    %157 = vector.broadcast %101 : vector<1x128xf32> to vector<10x128xf32>
    %158 = arith.mulf %156, %157 : vector<10x128xf32>
    %159 = arith.sitofp %77 : vector<1x128xi32> to vector<1x128xf32>
    %160 = arith.extui %94 : vector<1x128xi1> to vector<1x128xi32>
    %161 = arith.sitofp %160 : vector<1x128xi32> to vector<1x128xf32>
    %162 = tpu.concatenate %86, %159, %161 in 0 : vector<1x128xf32>, vector<1x128xf32>, vector<1x128xf32> -> vector<3x128xf32>
    %163 = tpu.concatenate %152, %155, %158, %101, %162, %1 in 0 : vector<1x128xf32>, vector<4x128xf32>, vector<10x128xf32>, vector<1x128xf32>, vector<3x128xf32>, vector<5x128xf32> -> vector<24x128xf32>
    %c0_42 = arith.constant 0 : index
    %c0_43 = arith.constant 0 : index
    %c0_44 = arith.constant 0 : index
    %164 = vector.load %arg6[%c0_42, %c0_43, %c0_44] : memref<1x24x128xf32, #tpu.memory_space<vmem>>, vector<1x24x128xf32>
    %165 = vector.shape_cast %164 : vector<1x24x128xf32> to vector<24x128xf32>
    %166 = vector.shape_cast %163 : vector<24x128xf32> to vector<1x24x128xf32>
    tpu.vector_store %arg6[%c0_42, %c0_43, %c0_44], %166 {strides = array<i32>} : memref<1x24x128xf32, #tpu.memory_space<vmem>>, vector<1x24x128xf32>,
    return
  }
  func.func @transform_0(%arg0: i32, %arg1: memref<2xi32, #tpu.memory_space<smem>>, %arg2: memref<2xi32, #tpu.memory_space<smem>>) -> (i32, i32, i32) {
    %c0_i32 = arith.constant 0 : i32
    %c0_i32_0 = arith.constant 0 : i32
    %c0_i32_1 = arith.constant 0 : i32
    return %arg0, %c0_i32, %c0_i32_0 : i32, i32, i32
  }
  func.func @transform_1(%arg0: i32, %arg1: memref<2xi32, #tpu.memory_space<smem>>, %arg2: memref<2xi32, #tpu.memory_space<smem>>) -> (i32, i32, i32) {
    %c0_i32 = arith.constant 0 : i32
    %c0_i32_0 = arith.constant 0 : i32
    %c0_i32_1 = arith.constant 0 : i32
    %c0_i32_2 = arith.constant 0 : i32
    return %c0_i32, %c0_i32_0, %c0_i32_1 : i32, i32, i32
  }
  func.func @transform_2(%arg0: i32, %arg1: memref<2xi32, #tpu.memory_space<smem>>, %arg2: memref<2xi32, #tpu.memory_space<smem>>) -> (i32, i32, i32) {
    %c0_i32 = arith.constant 0 : i32
    %c0_i32_0 = arith.constant 0 : i32
    %c0_i32_1 = arith.constant 0 : i32
    %c0_i32_2 = arith.constant 0 : i32
    return %c0_i32, %c0_i32_0, %c0_i32_1 : i32, i32, i32
  }
  func.func @transform_3(%arg0: i32, %arg1: memref<2xi32, #tpu.memory_space<smem>>, %arg2: memref<2xi32, #tpu.memory_space<smem>>) -> (i32, i32, i32) {
    %c0_i32 = arith.constant 0 : i32
    %c0_i32_0 = arith.constant 0 : i32
    %c0_i32_1 = arith.constant 0 : i32
    return %arg0, %c0_i32, %c0_i32_0 : i32, i32, i32
  }
}

</mosaic_0001>

<llo_original>
// kernel: tpu_custom_call.1
$region0: #{tpu_custom_call.1}
  #allocation0 [shape = 'u32[]', space=smem, size = 0x4, offset = 0x4, fixed_abs, tag = 'smem constant byte address 0x4 - core index']
  #allocation1 [shape = 'u32[144,128]{1,0:T(1,128)}', space=vmem, size = 0x12000, scoped, tag = 'internal scratch']
  #allocation2 [shape = 'f32[1,128]{1,0:T(1,128)}', space=vmem, size = 0x200, scoped, tag = 'scratch operand']
  #allocation3 [shape = 's32[1]{0}', space=sflag, size = 0x4, scoped, tag = 'scoped memory for tpu_custom_call.1']
  #allocation4 [shape = 'u8[512]{0}', space=smem, size = 0x200, scoped, tag = 'prefetched SMEM operand 0']
  #allocation5 [shape = 'u8[512]{0}', space=smem, size = 0x200, scoped, tag = 'prefetched SMEM operand 1']
  %s0 = inlined_call_operand.vmem [shape: s32[2], index: 0, kind: input, shape index: {}]
  %s1 = inlined_call_operand.vmem [shape: s32[2], index: 1, kind: input, shape index: {}]
  %s2 = inlined_call_operand.vmem [shape: f32[2,4,128], index: 2, kind: input, shape index: {}]
  %s3 = inlined_call_operand.vmem [shape: f32[2,8,14], index: 3, kind: input, shape index: {}]
  %s4 = inlined_call_operand.vmem [shape: f32[2,8,4], index: 4, kind: input, shape index: {}]
  %s5 = inlined_call_operand.hbm [shape: f32[2,24,128], index: 5, kind: output, shape index: {}]
  %s6 = sld [smem:[#allocation0]]
  $region49: #{tpu_custom_call.1} parent=0
    _
  %s8 = ssub.s32 1, %s6
  %s9 = scalar_select 0, %s8, %s6
  %s10 = sshll.u32 %s0, 4
  %s11 = int_to_ptr.vmem [resolvable:$true] %s10
  %13 = dma.vmem_to_smem %s11, 16, [#allocation4], [#allocation3]
  %s14 = sshll.u32 %s1, 4
  %s15 = int_to_ptr.vmem [resolvable:$true] %s14
  %17 = dma.vmem_to_smem %s15, 16, [#allocation5], [#allocation3]
  %18 = dma.done [#allocation3], 32
  %19 = sfence
  $region1: #{tpu_custom_call.1} parent=0
    #allocation6 [shape = 'u8[24576]{0}', space=vmem, size = 0x6000, scoped, tag = 'output window, operand 0']
    #allocation7 [shape = 's32[2]{0}', space=sflag, size = 0x8, scoped, tag = 'scoped memory for tpu_custom_call.1']
    %20 = vsyncpa [#allocation7], 0
    %s21 = scalar_lea.sflag [#allocation7], 1
    %22 = vsyncpa %s21, 0
    loop: start=0, step=1, limit=4
    $region2: #{tpu_custom_call.1} parent=1 // loop_pre_header
      _
    $region3: #{tpu_custom_call.1} parent=1 // loop_header
      %s24 = sphi 0, %s28
      %p25 = scmp.ge.s32.totalorder %s24, 4
      %s34 = sphi 0, %s36
      %s37 = sphi 0, %s34
      %s38 = sphi 0, %s37
      %s54 = sphi 0, %s38
      %s58 = sphi 0, %s58
      %s60 = sphi 0, %s58
      %s61 = sphi 0, %s60
      %s75 = sphi 0, %s61
      %s79 = sphi 0, %s79
      %s81 = sphi 0, %s79
      %s82 = sphi 0, %s81
      %s96 = sphi 0, %s82
      %s102 = sphi 0, %s104
      %s105 = sphi 0, %s102
      %s106 = sphi 0, %s105
      %s122 = sphi 0, %s106
    $region4: #{tpu_custom_call.1} parent=1 // loop_header_branch
      %27 = sbr.rel (%p25) target = $region8
    $region5: #{tpu_custom_call.1} parent=1 // loop_body
      %s29 = ssub.s32 %s24, 1
      %s30 = ssub.s32 %s24, 2
      %s31 = sadd.s32 %s24, 1
      %s32 = ssub.s32 %s24, %s31
      %p33 = scmp.eq.s32.totalorder %s32, 0
      %s35 = sadd.s32 %s34, 1
      %s36 = scalar_select %p33, %s34, %s35
      %p39 = pneg %p33
      %p40 = scmp.eq.s32.totalorder %s24, 1
      %p41 = por %p39, %p40
      %p42 = scmp.ne.s32.totalorder %s34, %s37
      %p43 = scmp.eq.s32.totalorder %s24, 0
      %p44 = por %p42, %p43
      %p45 = scmp.ne.s32.totalorder %s34, %s37
      %p46 = scmp.eq.s32.totalorder %s29, 1
      %p47 = por %p45, %p46
      %p48 = scmp.ne.s32.totalorder %s37, %s38
      %p49 = scmp.eq.s32.totalorder %s29, 0
      %p50 = por %p48, %p49
      %p51 = scmp.ne.s32.totalorder %s37, %s38
      %p52 = scmp.eq.s32.totalorder %s30, 1
      %p53 = por %p51, %p52
      %p55 = scmp.ne.s32.totalorder %s38, %s54
      %p56 = scmp.eq.s32.totalorder %s30, 0
      %p57 = por %p55, %p56
      %s59 = sadd.s32 %s58, 1
      %p62 = scmp.eq.s32.totalorder %s24, 1
      %p63 = scmp.ne.s32.totalorder %s58, %s60
      %p64 = scmp.eq.s32.totalorder %s24, 0
      %p65 = por %p63, %p64
      %p66 = scmp.ne.s32.totalorder %s58, %s60
      %p67 = scmp.eq.s32.totalorder %s29, 1
      %p68 = por %p66, %p67
      %p69 = scmp.ne.s32.totalorder %s60, %s61
      %p70 = scmp.eq.s32.totalorder %s29, 0
      %p71 = por %p69, %p70
      %p72 = scmp.ne.s32.totalorder %s60, %s61
      %p73 = scmp.eq.s32.totalorder %s30, 1
      %p74 = por %p72, %p73
      %p76 = scmp.ne.s32.totalorder %s61, %s75
      %p77 = scmp.eq.s32.totalorder %s30, 0
      %p78 = por %p76, %p77
      %s80 = sadd.s32 %s79, 1
      %p83 = scmp.eq.s32.totalorder %s24, 1
      %p84 = scmp.ne.s32.totalorder %s79, %s81
      %p85 = scmp.eq.s32.totalorder %s24, 0
      %p86 = por %p84, %p85
      %p87 = scmp.ne.s32.totalorder %s79, %s81
      %p88 = scmp.eq.s32.totalorder %s29, 1
      %p89 = por %p87, %p88
      %p90 = scmp.ne.s32.totalorder %s81, %s82
      %p91 = scmp.eq.s32.totalorder %s29, 0
      %p92 = por %p90, %p91
      %p93 = scmp.ne.s32.totalorder %s81, %s82
      %p94 = scmp.eq.s32.totalorder %s30, 1
      %p95 = por %p93, %p94
      %p97 = scmp.ne.s32.totalorder %s82, %s96
      %p98 = scmp.eq.s32.totalorder %s30, 0
      %p99 = por %p97, %p98
      %s100 = ssub.s32 %s24, %s31
      %p101 = scmp.eq.s32.totalorder %s100, 0
      %s103 = sadd.s32 %s102, 1
      %s104 = scalar_select %p101, %s102, %s103
      %p107 = pneg %p101
      %p108 = scmp.eq.s32.totalorder %s24, 1
      %p109 = por %p107, %p108
      %p110 = scmp.ne.s32.totalorder %s102, %s105
      %p111 = scmp.eq.s32.totalorder %s24, 0
      %p112 = por %p110, %p111
      %p113 = scmp.ne.s32.totalorder %s102, %s105
      %p114 = scmp.eq.s32.totalorder %s29, 1
      %p115 = por %p113, %p114
      %p116 = scmp.ne.s32.totalorder %s105, %s106
      %p117 = scmp.eq.s32.totalorder %s29, 0
      %p118 = por %p116, %p117
      %p119 = scmp.ne.s32.totalorder %s105, %s106
      %p120 = scmp.eq.s32.totalorder %s30, 1
      %p121 = por %p119, %p120
      %p123 = scmp.ne.s32.totalorder %s106, %s122
      %p124 = scmp.eq.s32.totalorder %s30, 0
      %p125 = por %p123, %p124
      %p126 = scmp.le.s32.totalorder 1, %s24
      %p127 = scmp.lt.s32.totalorder %s24, 3
      %p128 = pnand %p126, %p127
      %p129 = pneg %p128
      // Predicated region
      $region9: #{tpu_custom_call.1} parent=5 // pred_check
        _
      $region10: #{tpu_custom_call.1} parent=5 // pred_check_branch
        %131 = sbr.rel (%p128) target = $region12
      $region11: #{tpu_custom_call.1} parent=5 // pred_region
        %s132 = ssub.s32 %s24, 1
        // Predicated region
        $region13: #{tpu_custom_call.1} parent=11 // pred_check
          %p133 = pneg %p71
        $region14: #{tpu_custom_call.1} parent=11 // pred_check_branch
          %135 = sbr.rel (%p133) target = $region16
        $region15: #{tpu_custom_call.1} parent=11 // pred_region
          _
        $region16: #{tpu_custom_call.1} parent=11 // pred_fallthru
          _
        // Predicated region
        $region17: #{tpu_custom_call.1} parent=11 // pred_check
          %p136 = pneg %p92
        $region18: #{tpu_custom_call.1} parent=11 // pred_check_branch
          %138 = sbr.rel (%p136) target = $region20
        $region19: #{tpu_custom_call.1} parent=11 // pred_region
          _
        $region20: #{tpu_custom_call.1} parent=11 // pred_fallthru
          _
      $region12: #{tpu_custom_call.1} parent=5 // pred_fallthru
        _
      %p139 = scmp.lt.s32.totalorder %s24, 2
      // Predicated region
      $region21: #{tpu_custom_call.1} parent=5 // pred_check
        %p140 = pneg %p139
      $region22: #{tpu_custom_call.1} parent=5 // pred_check_branch
        %142 = sbr.rel (%p140) target = $region24
      $region23: #{tpu_custom_call.1} parent=5 // pred_region
        // Predicated region
        $region25: #{tpu_custom_call.1} parent=23 // pred_check
          %p143 = pneg %p44
        $region26: #{tpu_custom_call.1} parent=23 // pred_check_branch
          %145 = sbr.rel (%p143) target = $region28
        $region27: #{tpu_custom_call.1} parent=23 // pred_region
          %p146 = scmp.lt.s32.totalorder %s24, 1
          %s147 = scalar_select %p146, %s24, 1
          %s148 = smul.addr %s147, 4
          %s149 = scalar_lea.vmem %s2, %s148
        $region28: #{tpu_custom_call.1} parent=23 // pred_fallthru
          _
      $region24: #{tpu_custom_call.1} parent=5 // pred_fallthru
        _
      %p150 = scmp.le.s32.totalorder 1, %s24
      %p151 = scmp.lt.s32.totalorder %s24, 3
      %p152 = pnand %p150, %p151
      %p153 = pneg %p152
      // Predicated region
      $region29: #{tpu_custom_call.1} parent=5 // pred_check
        _
      $region30: #{tpu_custom_call.1} parent=5 // pred_check_branch
        %155 = sbr.rel (%p152) target = $region32
      $region31: #{tpu_custom_call.1} parent=5 // pred_region
        %s156 = ssub.s32 %s24, 1
        %p157 = scmp.lt.s32.totalorder %s29, 1
        %s158 = scalar_select %p157, %s29, 1
        %s159 = smul.addr %s158, 4
        %s160 = scalar_lea.vmem %s2, %s159
        %p161 = pneg %p50
        %p162 = pneg %p47
        %p163 = pneg %p71
        %p164 = pneg %p68
        %p165 = pneg %p92
        %p166 = pneg %p89
        %p167 = pneg %p118
        %p168 = pneg %p115
        %s169 = sand.u32 %s105, 1
        %s170 = scalar_lea.sflag [#allocation7], %s169
        %s171 = sand.u32 %s105, 1
        %s172 = smul.addr %s171, 24
        %s173 = scalar_lea.vmem [#allocation6], %s172
        %p174 = scmp.lt.s32.totalorder %s29, 1
        %s175 = scalar_select %p174, %s29, 1
        %s176 = smul.addr %s175, 4
        %s177 = scalar_lea.vmem %s2, %s176
        %v178 = vlaneseq
        %v179 = vshrl.u32 %v178, 7
        %v180 = vld [vmem:[%s177] sm:$0xf]
        %s181 = smul.u32 %s29, 8
        %s182 = scalar_lea.vmem %s3, %s181
        %v183 = vld [vmem:[%s182] sm:$0xff]
        %s184 = scalar_lea.vmem %s4, %s181
        %v185 = vld [vmem:[%s184] sm:$0xff]
        %s186 = sld [smem:[#allocation4 + %s29]]
        %s187 = sld [smem:[#allocation5 + %s29]]
        %v188 = vlaneseq
        %v189 = vshrl.u32 %v188, 7
        %v190 = vsub.s32 2, %v189
        %v191 = vrot.slane %v180, %v190
        %193 = vset.pattern.permute.xlu0 2
        %194 = vperm.xlu0 %193, %v183
        %v195 = vpop.permute.xlu0 %194
        %v197 = vmin.f32 %v191, %v195
        %v198 = vlaneseq
        %v199 = vshrl.u32 %v198, 7
        %v200 = vsub.s32 0, %v199
        %v201 = vrot.slane %v180, %v200
        %202 = vset.pattern.permute.xlu0 0
        %203 = vperm.xlu0 %202, %v183
        %v204 = vpop.permute.xlu0 %203
        %v206 = vmax.f32 %v201, %v204
        %v207 = vsub.f32 %v197, %v206
        %v208 = vmax.f32 %v207, 0.0
        %v209 = vlaneseq
        %v210 = vshrl.u32 %v209, 7
        %v211 = vsub.s32 3, %v210
        %v212 = vrot.slane %v180, %v211
        %213 = vset.pattern.permute.xlu0 3
        %214 = vperm.xlu0 %213, %v183
        %v215 = vpop.permute.xlu0 %214
        %v217 = vmin.f32 %v212, %v215
        %v218 = vlaneseq
        %v219 = vshrl.u32 %v218, 7
        %v220 = vsub.s32 1, %v219
        %v221 = vrot.slane %v180, %v220
        %222 = vset.pattern.permute.xlu0 1
        %223 = vperm.xlu0 %222, %v183
        %v224 = vpop.permute.xlu0 %223
        %v226 = vmax.f32 %v221, %v224
        %v227 = vsub.f32 %v217, %v226
        %v228 = vmax.f32 %v227, 0.0
        %v229 = vmul.f32 %v208, %v228
        %v231 = vrot.slane %v180, 6
        %v233 = vsub.f32 %v180, %v231
        %v235 = vrot.slane %v233, 1
        %v237 = vmul.f32 %v233, %v235
        %238 = vrot.lane.b32.xlu0 %v183, 2
        %v239 = vpop.permute.xlu0 %238
        %v241 = vsub.f32 %v183, %v239
        %243 = vrot.lane.b32.xlu0 %v241, 127
        %v244 = vpop.permute.xlu0 %243
        %v246 = vmul.f32 %v241, %v244
        %v247 = vlaneseq
        %v248 = vshrl.u32 %v247, 7
        %v249 = vsub.s32 2, %v248
        %v250 = vrot.slane %v237, %v249
        %252 = vset.pattern.permute.xlu0 2
        %253 = vperm.xlu0 %252, %v246
        %v254 = vpop.permute.xlu0 %253
        %v256 = vadd.f32 %v250, %v254
        %v257 = vsub.f32 %v256, %v229
        %v258 = vadd.f32 %v257, 1e-06
        %v259 = vrcp.pop %v258
        %v260 = vmul.f32 %v258, %v259
        %v261 = vsub.f32 2.0, %v260
        %v262 = vmul.f32 %v259, %v261
        %v263 = vmul.f32 %v229, %v262
        %v264 = vstv %s186
        %vm265 = vcmp.lt.s32.totalorder %v179, %v264
        %v266 = vsel %vm265, %v263, -1.0
        %v267 = vrot.slane %v266, 4
        %v268 = vmax.f32 %v266, %v267
        %v269 = vrot.slane %v268, 2
        %v270 = vmax.f32 %v268, %v269
        %v271 = vrot.slane %v270, 1
        %v272 = vmax.f32 %v270, %v271
        %vm273 = vcmp.ge.f32.partialorder %v266, %v272
        %vm274 = vmand %vm273, %vm265
        %v275 = vsel %vm274, %v179, 8
        %v276 = vrot.slane %v275, 4
        %vm277 = vcmp.lt.s32.totalorder %v275, %v276
        %v278 = vsel %vm277, %v275, %v276
        %v279 = vrot.slane %v278, 2
        %vm280 = vcmp.lt.s32.totalorder %v278, %v279
        %v281 = vsel %vm280, %v278, %v279
        %v282 = vrot.slane %v281, 1
        %vm283 = vcmp.lt.s32.totalorder %v281, %v282
        %v284 = vsel %vm283, %v281, %v282
        %vm285 = vcmp.ge.s32.totalorder %v284, 8
        %v286 = vsel %vm285, 4294967295, %v284
        %vm287 = vcmp.ge.f32.partialorder %v272, 0.5
        %vm288 = vcmp.lt.f32.partialorder %v272, 0.4
        %v289 = vsel %vm287, 1, 0
        %v290 = vcvt.s32.f32 %v289
        %v291 = vsel %vm288, 1, 0
        %v292 = vcvt.s32.f32 %v291
        %v293 = vsub.f32 %v290, %v292
        %294 = vst [vmem:[#allocation2] sm:$0x1] 0.0
        %p295 = scmp.gt.s32.totalorder %s187, 0
        // Predicated region
        $region33: #{tpu_custom_call.1} parent=31 // pred_check
          %p296 = pneg %p295
        $region34: #{tpu_custom_call.1} parent=31 // pred_check_branch
          %298 = sbr.rel (%p296) target = $region36
        $region35: #{tpu_custom_call.1} parent=31 // pred_region
          %300 = vset.pattern.permute.xlu0 2
          %301 = vperm.xlu0 %300, %v185
          %v302 = vpop.permute.xlu0 %301
          %v304 = vmin.f32 %v191, %v302
          %305 = vset.pattern.permute.xlu0 0
          %306 = vperm.xlu0 %305, %v185
          %v307 = vpop.permute.xlu0 %306
          %v309 = vmax.f32 %v201, %v307
          %v310 = vsub.f32 %v304, %v309
          %v311 = vmax.f32 %v310, 0.0
          %312 = vset.pattern.permute.xlu0 3
          %313 = vperm.xlu0 %312, %v185
          %v314 = vpop.permute.xlu0 %313
          %v316 = vmin.f32 %v212, %v314
          %317 = vset.pattern.permute.xlu0 1
          %318 = vperm.xlu0 %317, %v185
          %v319 = vpop.permute.xlu0 %318
          %v321 = vmax.f32 %v221, %v319
          %v322 = vsub.f32 %v316, %v321
          %v323 = vmax.f32 %v322, 0.0
          %v324 = vmul.f32 %v311, %v323
          %v325 = vadd.f32 %v237, 1e-06
          %v326 = vrcp.pop %v325
          %v327 = vmul.f32 %v325, %v326
          %v328 = vsub.f32 2.0, %v327
          %v329 = vmul.f32 %v326, %v328
          %v330 = vlaneseq
          %v331 = vshrl.u32 %v330, 7
          %v332 = vsub.s32 2, %v331
          %v333 = vrot.slane %v329, %v332
          %v334 = vmul.f32 %v324, %v333
          %v335 = vstv %s187
          %vm336 = vcmp.lt.s32.totalorder %v179, %v335
          %v337 = vsel %vm336, %v334, 0.0
          %v338 = vrot.slane %v337, 4
          %v339 = vmax.f32 %v337, %v338
          %v340 = vrot.slane %v339, 2
          %v341 = vmax.f32 %v339, %v340
          %v342 = vrot.slane %v341, 1
          %v343 = vmax.f32 %v341, %v342
          %344 = vst [vmem:[#allocation2] sm:$0x1] %v343
        $region36: #{tpu_custom_call.1} parent=31 // pred_fallthru
          _
        %v345 = vld [vmem:[#allocation2] sm:$0x1]
        %vm346 = vcmp.gt.f32.partialorder %v345, 0.5
        %vm347 = vcmp.eq.s32.totalorder %v179, %v286
        %v348 = vsel %vm347, 1, 0
        %v349 = vcvt.s32.f32 %v348
        %350 = vxpose.xlu0.b32.start [1/16] %v183, 128
        %351 = vxpose.xlu0.b32.cont [2/16] 0.0, 128
        %352 = vxpose.xlu0.b32.cont [3/16] 0.0, 128
        %353 = vxpose.xlu0.b32.cont [4/16] 0.0, 128
        %354 = vxpose.xlu0.b32.cont [5/16] 0.0, 128
        %355 = vxpose.xlu0.b32.cont [6/16] 0.0, 128
        %356 = vxpose.xlu0.b32.cont [7/16] 0.0, 128
        %357 = vxpose.xlu0.b32.cont [8/16] 0.0, 128
        %358 = vxpose.xlu0.b32.cont [9/16] 0.0, 128
        %359 = vxpose.xlu0.b32.cont [10/16] 0.0, 128
        %360 = vxpose.xlu0.b32.cont [11/16] 0.0, 128
        %361 = vxpose.xlu0.b32.cont [12/16] 0.0, 128
        %362 = vxpose.xlu0.b32.cont [13/16] 0.0, 128
        %363 = vxpose.xlu0.b32.cont [14/16] 0.0, 128
        %364 = vxpose.xlu0.b32.cont [15/16] 0.0, 128
        %365 = vxpose.xlu0.b32.end [16/16] 0.0, 128
        %v366 = vpop.trf.xlu0
        %v367 = vpop.trf.xlu0
        %v368 = vpop.trf.xlu0
        %v369 = vpop.trf.xlu0
        %v370 = vpop.trf.xlu0
        %v371 = vpop.trf.xlu0
        %v372 = vpop.trf.xlu0
        %v373 = vpop.trf.xlu0
        %v374 = vpop.trf.xlu0
        %v375 = vpop.trf.xlu0
        %v376 = vpop.trf.xlu0
        %v377 = vpop.trf.xlu0
        %v378 = vpop.trf.xlu0
        %v379 = vpop.trf.xlu0
        %v380 = vpop.trf.xlu0
        %v381 = vpop.trf.xlu0
        %vm382 = vcmask 64512
        %v384 = vsel %vm382, %v366, 0
        %v387 = vsel %vm382, %v367, 0
        %389 = vmatprep.subr.mxu0 0.0
        %390 = vmatpush1.msra.mxu0 0.0
        %391 = vmatprep.subr.mxu0 0.0
        %392 = vmatpush1.msra.mxu0 0.0
        %393 = vmatprep.subr.mxu0 0.0
        %394 = vmatpush1.msra.mxu0 0.0
        %395 = vmatprep.subr.mxu0 0.0
        %396 = vmatpush1.msra.mxu0 0.0
        %397 = vmatprep.subr.mxu0 0.0
        %398 = vmatpush1.msra.mxu0 0.0
        %399 = vmatprep.subr.mxu0 0.0
        %400 = vmatpush1.msra.mxu0 0.0
        %401 = vmatprep.subr.mxu0 0.0
        %402 = vmatpush1.msra.mxu0 0.0
        %403 = vmatprep.subr.mxu0 0.0
        %404 = vmatpush1.msra.mxu0 0.0
        %405 = vmatprep.subr.mxu0 0.0
        %406 = vmatpush1.msra.mxu0 0.0
        %407 = vmatprep.subr.mxu0 0.0
        %408 = vmatpush1.msra.mxu0 0.0
        %409 = vmatprep.subr.mxu0 0.0
        %410 = vmatpush1.msra.mxu0 0.0
        %411 = vmatprep.subr.mxu0 0.0
        %412 = vmatpush1.msra.mxu0 0.0
        %413 = vmatprep.subr.mxu0 0.0
        %414 = vmatpush1.msra.mxu0 0.0
        %415 = vmatprep.subr.mxu0 0.0
        %416 = vmatpush1.msra.mxu0 0.0
        %417 = vmatprep.subr.mxu0 0.0
        %418 = vmatpush1.msra.mxu0 0.0
        %419 = vmatprep.subr.mxu0 0.0
        %420 = vmatpush1.msra.mxu0 %v349
        %421 = vmatprep.subr.mxu0 0.0
        %422 = vmatpush2.msra.mxu0 0.0
        %423 = vmatprep.subr.mxu0 0.0
        %424 = vmatpush2.msra.mxu0 0.0
        %425 = vmatprep.subr.mxu0 0.0
        %426 = vmatpush2.msra.mxu0 0.0
        %427 = vmatprep.subr.mxu0 0.0
        %428 = vmatpush2.msra.mxu0 0.0
        %429 = vmatprep.subr.mxu0 0.0
        %430 = vmatpush2.msra.mxu0 0.0
        %431 = vmatprep.subr.mxu0 0.0
        %432 = vmatpush2.msra.mxu0 0.0
        %433 = vmatprep.subr.mxu0 0.0
        %434 = vmatpush2.msra.mxu0 0.0
        %435 = vmatprep.subr.mxu0 0.0
        %436 = vmatpush2.msra.mxu0 0.0
        %437 = vmatprep.subr.mxu0 0.0
        %438 = vmatpush2.msra.mxu0 0.0
        %439 = vmatprep.subr.mxu0 0.0
        %440 = vmatpush2.msra.mxu0 0.0
        %441 = vmatprep.subr.mxu0 0.0
        %442 = vmatpush2.msra.mxu0 0.0
        %443 = vmatprep.subr.mxu0 0.0
        %444 = vmatpush2.msra.mxu0 0.0
        %445 = vmatprep.subr.mxu0 0.0
        %446 = vmatpush2.msra.mxu0 0.0
        %447 = vmatprep.subr.mxu0 0.0
        %448 = vmatpush2.msra.mxu0 0.0
        %449 = vmatprep.subr.mxu0 0.0
        %450 = vmatpush2.msra.mxu0 0.0
        %451 = vmatprep.subr.mxu0 0.0
        %452 = vmatpush2.msra.mxu0 0.0
        %453 = vmatprep.mubr.f32.mxu0 0.0
        %454 = vmatmul.mubr.f32.gmra.mxu0 %v384
        %v455 = vpop.f32.mrf.mxu0
        %v456 = vadd.f32 0.0, %v455
        %v457 = vpop.f32.mrf.mxu0
        %458 = vmatprep.mubr.f32.mxu0 0.0
        %459 = vmatmul.mubr.f32.gmra.mxu0 %v387
        %v460 = vpop.f32.mrf.mxu0
        %v461 = vadd.f32 0.0, %v460
        %v462 = vpop.f32.mrf.mxu0
        %463 = vdwg.mxu0
        %v464 = vmax.f32 %v233, 1e-06
        %v465 = vrcp.pop %v464
        %v466 = vmul.f32 1.0, %v465
        %v467 = vrot.slane %v180, 2
        %v469 = vadd.f32 %v180, %v467
        %v470 = vmul.f32 %v469, 0.5
        %v472 = vrot.slane %v456, 6
        %v474 = vsub.f32 %v456, %v472
        %v475 = vmax.f32 %v474, 1e-06
        %v476 = vrot.slane %v456, 2
        %v478 = vadd.f32 %v456, %v476
        %v479 = vmul.f32 %v478, 0.5
        %v480 = vsub.f32 %v479, %v470
        %v482 = vrot.slane %v466, 2
        %v484 = vmul.f32 %v480, %v482
        %v485 = vmul.f32 %v475, %v466
        %v486 = vlog2.pop %v485
        %v487 = vmul.f32 %v486, 0.6931472
        %vm488 = vcmp.eq.f32.partialorder %v293, 0.0
        %v489 = vsel %vm488, -1.0, 0.0
        %v490 = vsel %vm287, 1.0, %v489
        %vm491 = vmxor %vm287, 1
        %vm492 = vmand %vm346, %vm491
        %v493 = vsel %vm492, -1.0, %v490
        %vm494 = vcmask 1040384
        %vm495 = vcmask 1041408
        %v496 = vsel %vm495, %v484, %v487
        %vm497 = vcmask 1042432
        %v498 = vsel %vm497, %v496, %v487
        %v499 = vmul.f32 %v498, %v290
        %v500 = vmul.f32 %v456, %v290
        %v501 = vmul.f32 %v461, %v290
        %v502 = vcvt.s32.f32 %v286
        %v503 = vsel %vm346, 1, 0
        %v504 = vcvt.s32.f32 %v503
        %v506 = vlaneseq
        %v507 = vshrl.u32 %v506, 7
        %v508 = vsub.s32 0, %v507
        %v509 = vrot.slane %v504, %v508
        %v511 = vsel %vm494, %v293, %v502
        %v512 = vsel %vm495, %v511, %v509
        %v514 = vrot.slane %v499, 7
        %v518 = vrot.slane %v500, 7
        %v519 = vrot.slane %v501, 7
        %v520 = vsel %vm494, %v518, %v519
        %v523 = vsel %vm494, %v493, %v514
        %vm524 = vcmask 1044480
        %v525 = vsel %vm524, %v523, %v518
        %vm526 = vcmask 1046528
        %v527 = vsel %vm526, %v520, %v290
        %v528 = vsel %vm497, %v512, 0.0
        %529 = vst [vmem:[%s173] sm:$0xff] %v525
        %530 = vst [vmem:[%s173 + $0x8] sm:$0xff] %v527
        %531 = vst [vmem:[%s173 + $0x10] sm:$0xff] %v528
        %s532 = sand.u32 %s105, 1
        %s533 = scalar_lea.sflag [#allocation7], %s532
        %s534 = sand.u32 %s105, 1
        %s535 = smul.addr %s534, 24
        %s536 = scalar_lea.vmem [#allocation6], %s535
        // Predicated region
        $region37: #{tpu_custom_call.1} parent=31 // pred_check
          %p537 = pneg %p115
        $region38: #{tpu_custom_call.1} parent=31 // pred_check_branch
          %539 = sbr.rel (%p537) target = $region40
        $region39: #{tpu_custom_call.1} parent=31 // pred_region
          %s541 = ssub.s32 384, 384
          %542 = vsyncadd %s533, %s541
          %s543 = smul.addr %s29, 3
          %s544 = smul.addr %s543, 128
          %s545 = scalar_lea.hbm %s5, %s544
          %s546 = sshll.u32 %s536, 4
          %s547 = int_to_ptr.vmem [resolvable:$true] %s546
          %552 = dma.vmem_to_hbm [thread:$0]  %s547, 384, %s545, %s533, 128, 128, 8
        $region40: #{tpu_custom_call.1} parent=31 // pred_fallthru
          _
      $region32: #{tpu_custom_call.1} parent=5 // pred_fallthru
        _
      %p553 = scmp.le.s32.totalorder 2, %s24
      // Predicated region
      $region41: #{tpu_custom_call.1} parent=5 // pred_check
        %p554 = pneg %p553
      $region42: #{tpu_custom_call.1} parent=5 // pred_check_branch
        %556 = sbr.rel (%p554) target = $region44
      $region43: #{tpu_custom_call.1} parent=5 // pred_region
        %s557 = ssub.s32 %s24, 2
        // Predicated region
        $region45: #{tpu_custom_call.1} parent=43 // pred_check
          %p558 = pneg %p121
        $region46: #{tpu_custom_call.1} parent=43 // pred_check_branch
          %560 = sbr.rel (%p558) target = $region48
        $region47: #{tpu_custom_call.1} parent=43 // pred_region
          %s561 = sand.u32 %s106, 1
          %s562 = scalar_lea.sflag [#allocation7], %s561
          %s563 = sand.u32 %s106, 1
          %s564 = smul.addr %s563, 24
          %s565 = scalar_lea.vmem [#allocation6], %s564
          %566 = dma.done %s562, 384
        $region48: #{tpu_custom_call.1} parent=43 // pred_fallthru
          _
      $region44: #{tpu_custom_call.1} parent=5 // pred_fallthru
        _
    $region6: #{tpu_custom_call.1} parent=1 // loop_footer
      %s28 = sadd.s32 1, %s24
    $region7: #{tpu_custom_call.1} parent=1 // loop_footer_branch
      %23 = sbr.rel target = $region3
    $region8: #{tpu_custom_call.1} parent=1 // loop_exit
      _
    %567 = vsyncpa [#allocation7], 1
    %s568 = scalar_lea.sflag [#allocation7], 1
    %569 = vsyncpa %s568, 1

</llo_original>
